<compile_context>
chip_gen: v7x
topology: tpu7x:2x2x1
jax: 0.10.0
libtpu: 0.0.40
codegen_flags: <defaults>
</compile_context>

<pallas_src>
import jax
import jax.numpy as jnp
from jax.experimental import pallas as pl
from jax.experimental.pallas import tpu as pltpu


# ---------------------------------------------------------------------------
# Pallas kernel
# ---------------------------------------------------------------------------

def _spectral_mul_kernel(xr_ref, xi_ref, wr_ref, wi_ref, or_ref, oi_ref):
    """out[o, m] = sum_i x[i, m] * w[i, o, m]   (complex, f32 accumulation).

    Block shapes:
      xr_ref / xi_ref : (1, Cin, tM)
      wr_ref / wi_ref : (Cin, tCo, tM)   (f32 or bf16; upcast per step)
      or_ref / oi_ref : (1, tCo, tM)
    """
    cin = wr_ref.shape[0]
    tco, tm = or_ref.shape[1], or_ref.shape[2]

    def step(i, acc_r, acc_i):
        # Broadcast the x row to (tCo, tM) once and reuse it in both products
        # (an implicit broadcast inside each multiply is not CSE'd).
        xr_i = jnp.broadcast_to(xr_ref[0, pl.ds(i, 1), :], (tco, tm))
        xi_i = jnp.broadcast_to(xi_ref[0, pl.ds(i, 1), :], (tco, tm))
        wr_i = wr_ref[i].astype(jnp.float32)       # (tCo, tM)
        wi_i = wi_ref[i].astype(jnp.float32)
        acc_r = acc_r + (xr_i * wr_i - xi_i * wi_i)
        acc_i = acc_i + (xr_i * wi_i + xi_i * wr_i)
        return acc_r, acc_i

    acc_r = jnp.zeros((tco, tm), jnp.float32)
    acc_i = jnp.zeros((tco, tm), jnp.float32)

    if cin <= 16:
        # Small Cin: fully unrolled with static indices.
        for i in range(cin):
            acc_r, acc_i = step(i, acc_r, acc_i)
    else:
        # unroll=4 keeps (weight tiles in flight + 16-vreg accumulators)
        # inside the 64-vreg file (unroll=8 spilled at tCo*tM == 8192).
        acc_r, acc_i = jax.lax.fori_loop(
            0, cin, lambda i, c: step(i, *c), (acc_r, acc_i), unroll=4)

    or_ref[0] = acc_r
    oi_ref[0] = acc_i


# ---------------------------------------------------------------------------
# Tile / VMEM heuristics
# ---------------------------------------------------------------------------

def _round_up(x, m):
    return -(-x // m) * m


def _hw_params():
    """Return (max_lane_tile, weight_block_byte_cap, scoped_vmem_byte_cap)."""
    try:
        phys = pltpu.get_tpu_info().vmem_capacity_bytes
    except Exception:  # query unavailable -> be conservative (v7x budget)
        phys = 64 * 1024 * 1024
    if phys > 100 * 1024 * 1024:
        # v5e / v6e class: 128 MiB physical VMEM per TensorCore.
        return 1024, 8 * 1024 * 1024, 64 * 1024 * 1024
    # v7x class: 64 MiB physical VMEM per TensorCore.
    return 512, 4 * 1024 * 1024, 32 * 1024 * 1024


def _lane_eff(tm):
    """Measured fraction of HBM roofline vs lane-tile width (tiled f32 add)."""
    if tm >= 512:
        return 0.85
    if tm >= 384:
        return 0.75
    if tm >= 256:
        return 0.63
    return 0.29


def _choose_lane_tile(m, max_tm):
    """Pick (tM, M_pad): tM a multiple of 128, M_pad a multiple of tM.

    Trades DMA efficiency of wide lane tiles against padded-work waste; never
    degenerates to tM=128 just because 128 happens to divide a 128-rounded M.
    """
    m128 = _round_up(m, 128)
    if m128 <= max_tm:
        return m128, m128                      # single lane tile along M
    best_tm, best_cost = 128, None
    for tm in range(128, max_tm + 1, 128):
        m_pad = _round_up(m, tm)
        cost = m_pad / _lane_eff(tm)
        if best_cost is None or cost < best_cost - 1e-9 or (
                abs(cost - best_cost) <= 1e-9 and tm > best_tm):
            best_tm, best_cost = tm, cost
    return best_tm, _round_up(m, best_tm)


def _choose_cout_tile(cin, cout_pad, tm, wblk_cap_bytes, w_bytes):
    """Pick tCo (multiple of 8 dividing cout_pad) within vreg/VMEM budgets."""
    # acc_r + acc_i <= 16 vregs  ->  tCo * tM <= 8192 f32 elements.
    max_acc = max(8, 8192 // tm)
    # Each (Cin, tCo, tM) weight block under the per-generation cap so the
    # double-buffered r+i weight blocks stay within scoped VMEM.
    max_wblk = max(8, wblk_cap_bytes // (w_bytes * cin * tm))
    tco = 8
    for cand in range(8, cout_pad + 1, 8):
        if cout_pad % cand == 0 and cand <= max_acc and cand <= max_wblk:
            tco = cand
    return tco


# ---------------------------------------------------------------------------
# Kernel launcher
# ---------------------------------------------------------------------------

def spectral_mode_mix(xr, xi, wr, wi, *, lane_tile):
    """out[b,o,m] = sum_i x[b,i,m] * w[i,o,m] (complex via real/imag parts).

    xr, xi: (B, Cin, M_pad)  f32, M_pad a multiple of `lane_tile`.
    wr, wi: (Cin, Cout_pad, M_pad)  f32 or bf16 (already transposed & padded,
            Cout_pad a multiple of 8).
    Returns (out_r, out_i): (B, Cout_pad, M_pad) f32.
    """
    B, Cin, M_pad = xr.shape
    Cout_pad = wr.shape[1]
    assert M_pad % lane_tile == 0 and lane_tile % 128 == 0
    assert Cout_pad % 8 == 0 and wr.shape == (Cin, Cout_pad, M_pad)

    _, wblk_cap, vmem_cap = _hw_params()
    w_bytes = jnp.dtype(wr.dtype).itemsize
    tM = lane_tile
    tCo = _choose_cout_tile(Cin, Cout_pad, tM, wblk_cap, w_bytes)
    n_co, n_m = Cout_pad // tCo, M_pad // tM

    # Default pipeline double-buffers every operand; recompute the scoped-VMEM
    # limit from the chosen tiles (2x headroom for compiler scratch), capped
    # per hardware generation (v7x has only 64 MiB physical VMEM per TC).
    vmem_bytes = (2 * 2 * Cin * tM * 4                 # xr / xi blocks (f32)
                  + 2 * 2 * Cin * tCo * tM * w_bytes   # wr / wi blocks
                  + 2 * 2 * tCo * tM * 4)              # or / oi blocks (f32)
    vmem_limit = int(min(max(2 * vmem_bytes, 16 * 1024 * 1024), vmem_cap))

    grid_spec = pltpu.PrefetchScalarGridSpec(
        num_scalar_prefetch=0,
        # B innermost: the weight blocks' index_map is independent of b, so
        # their DMA is elided across the batch and each block is read from
        # HBM exactly once per core.  b is "arbitrary" so a v7x megacore
        # split lands on co/m (weights read once per chip, not per core).
        grid=(n_co, n_m, B),
        in_specs=[
            pl.BlockSpec((1, Cin, tM), lambda co, m, b: (b, 0, m)),
            pl.BlockSpec((1, Cin, tM), lambda co, m, b: (b, 0, m)),
            pl.BlockSpec((Cin, tCo, tM), lambda co, m, b: (0, co, m)),
            pl.BlockSpec((Cin, tCo, tM), lambda co, m, b: (0, co, m)),
        ],
        out_specs=[
            pl.BlockSpec((1, tCo, tM), lambda co, m, b: (b, co, m)),
            pl.BlockSpec((1, tCo, tM), lambda co, m, b: (b, co, m)),
        ],
    )
    out_shape = (jax.ShapeDtypeStruct((B, Cout_pad, M_pad), jnp.float32),
                 jax.ShapeDtypeStruct((B, Cout_pad, M_pad), jnp.float32))
    return pl.pallas_call(
        _spectral_mul_kernel,
        out_shape=out_shape,
        grid_spec=grid_spec,
        compiler_params=pltpu.CompilerParams(
            dimension_semantics=("parallel", "parallel", "arbitrary"),
            vmem_limit_bytes=vmem_limit),
    )(xr, xi, wr, wi)


# ---------------------------------------------------------------------------
# Module
# ---------------------------------------------------------------------------

class SpectralConv2dJAX:
    """JAX/Pallas re-implementation of the PyTorch SpectralConv2d forward."""

    def __init__(self, in_channels, out_channels, modes_height, modes_width,
                 fft_norm="forward", bias=True, key=None,
                 weight_stream_dtype=jnp.float32):
        assert modes_height == modes_width
        self.in_channels = in_channels
        self.out_channels = out_channels
        self.modes_height = modes_height
        self.modes_width = modes_width
        self.half_modes_width = modes_width // 2 + 1
        self.fft_norm = fft_norm

        if key is None:
            key = jax.random.PRNGKey(0)
        kr, ki = jax.random.split(key)
        std = jnp.sqrt(2.0 / (modes_height * modes_width))
        wshape = (out_channels, in_channels, modes_height, self.half_modes_width)
        # torch: view_as_real(complex(0,0)).normal_(std) -> real & imag ~ N(0, std^2)
        self.weight_r = (std * jax.random.normal(kr, wshape)).astype(jnp.float32)
        self.weight_i = (std * jax.random.normal(ki, wshape)).astype(jnp.float32)
        # torch: bias init zeros_
        self.bias = jnp.zeros((1, out_channels, 1, 1), jnp.float32) if bias else None
        # TODO(synk): `skip` (PointwiseOp) branch not instantiated (skip=False default).

        # Pre-flatten / transpose / zero-pad weights for the kernel:
        #   (Cout, Cin, mh, hw) -> (Cin, Cout_pad, M_pad),
        # Cout_pad a multiple of 8, M_pad a multiple of the chosen lane tile.
        # Band order (top rows then bottom rows) matches the x gathering below
        # because concatenating W[:, :, :n_top] and W[:, :, n_top:] is W itself.
        self._m = modes_height * self.half_modes_width
        max_tm, _, _ = _hw_params()
        self._tm, self._m_pad = _choose_lane_tile(self._m, max_tm)
        self._cout_pad = _round_up(out_channels, 8)
        pad_m = self._m_pad - self._m
        pad_co = self._cout_pad - out_channels
        wr_k = jnp.transpose(
            self.weight_r.reshape(out_channels, in_channels, self._m), (1, 0, 2))
        wi_k = jnp.transpose(
            self.weight_i.reshape(out_channels, in_channels, self._m), (1, 0, 2))
        pad_cfg = ((0, 0), (0, pad_co), (0, pad_m))
        self._wr_k = jnp.pad(wr_k, pad_cfg).astype(weight_stream_dtype)
        self._wi_k = jnp.pad(wi_k, pad_cfg).astype(weight_stream_dtype)

    def __call__(self, x):
        B, Cin, H, W = x.shape
        assert Cin == self.in_channels
        mh = self.modes_height
        n_top = mh // 2
        n_bot = mh - n_top          # matches torch's `-modes_height // 2:` slice
        hw = self.half_modes_width
        M, M_pad = self._m, self._m_pad

        xh = jnp.fft.rfft2(x, axes=(-2, -1), norm=self.fft_norm)  # (B,Cin,H,W//2+1)

        # Gather the two retained frequency bands, flatten mode dims, pad to M_pad.
        x_top = xh[:, :, :n_top, :hw]
        x_bot = xh[:, :, H - n_bot:, :hw]
        x_sel = jnp.concatenate([x_top, x_bot], axis=2).reshape(B, Cin, M)
        pad = ((0, 0), (0, 0), (0, M_pad - M))
        xr = jnp.pad(jnp.real(x_sel).astype(jnp.float32), pad)
        xi = jnp.pad(jnp.imag(x_sel).astype(jnp.float32), pad)

        # Hot path: complex contraction over in_channels in Pallas.
        or_, oi_ = spectral_mode_mix(xr, xi, self._wr_k, self._wi_k,
                                     lane_tile=self._tm)

        out_sel = (or_[:, :self.out_channels, :M]
                   + 1j * oi_[:, :self.out_channels, :M]).reshape(
                       B, self.out_channels, mh, hw)
        out_fft = jnp.zeros((B, self.out_channels, H, W // 2 + 1), jnp.complex64)
        out_fft = out_fft.at[:, :, :n_top, :hw].set(out_sel[:, :, :n_top])
        out_fft = out_fft.at[:, :, H - n_bot:, :hw].set(out_sel[:, :, n_top:])

        out = jnp.fft.irfft2(out_fft, s=(H, W), axes=(-2, -1), norm=self.fft_norm)
        if self.bias is not None:
            out = out + self.bias
        return out.astype(jnp.float32)


# ---------------------------------------------------------------------------
# Validation
# ---------------------------------------------------------------------------

def _reference_forward(module, x):
    """Pure-JAX reference (no Pallas) for validation."""
    B, Cin, H, W = x.shape
    mh = module.modes_height
    n_top = mh // 2
    n_bot = mh - n_top
    hw = module.half_modes_width
    w = module.weight_r + 1j * module.weight_i
    xh = jnp.fft.rfft2(x, axes=(-2, -1), norm=module.fft_norm)
    out_fft = jnp.zeros((B, module.out_channels, H, W // 2 + 1), jnp.complex64)
    out_fft = out_fft.at[:, :, :n_top, :hw].set(
        jnp.einsum("bixy,oixy->boxy", xh[:, :, :n_top, :hw], w[:, :, :n_top]))
    out_fft = out_fft.at[:, :, H - n_bot:, :hw].set(
        jnp.einsum("bixy,oixy->boxy", xh[:, :, H - n_bot:, :hw], w[:, :, n_top:]))
    out = jnp.fft.irfft2(out_fft, s=(H, W), axes=(-2, -1), norm=module.fft_norm)
    return out + module.bias


if __name__ == "__main__":
    key = jax.random.PRNGKey(0)
    kx, kw = jax.random.split(key)

    B, Cin, Cout, H, W = 2, 4, 4, 16, 16
    modes = 8
    x = jax.random.normal(kx, (B, Cin, H, W), dtype=jnp.float32)

    module = SpectralConv2dJAX(Cin, Cout, modes, modes, fft_norm="forward",
                               bias=True, key=kw)

    out = jax.block_until_ready(module(x))
    ref = jax.block_until_ready(_reference_forward(module, x))
    assert out.shape == (B, Cout, H, W)
    assert jnp.allclose(out, ref, atol=1e-5, rtol=1e-5), "mismatch vs reference"

    print("KERNEL_OK")
</pallas_src>

<mosaic_0001>
module attributes {stable_mosaic.version = 11 : i64} {
  func.func @_spectral_mul_kernel(%arg0: i32, %arg1: i32, %arg2: i32, %arg3: memref<1x4x128xf32, #tpu.memory_space<vmem>>, %arg4: memref<1x4x128xf32, #tpu.memory_space<vmem>>, %arg5: memref<4x8x128xf32, #tpu.memory_space<vmem>>, %arg6: memref<4x8x128xf32, #tpu.memory_space<vmem>>, %arg7: memref<1x8x128xf32, #tpu.memory_space<vmem>>, %arg8: memref<1x8x128xf32, #tpu.memory_space<vmem>>) attributes {dimension_semantics = [#tpu.dimension_semantics<parallel>, #tpu.dimension_semantics<parallel>, #tpu.dimension_semantics<arbitrary>], iteration_bounds = array<i64: 1, 1, 2>, scalar_prefetch = 0 : i64, scratch_operands = 0 : i64, tpu.core_type = #tpu.core_type<tc>, window_params = [{transform_indices = @transform_0, window_bounds = array<i64: 1, 4, 128>}, {transform_indices = @transform_1, window_bounds = array<i64: 1, 4, 128>}, {transform_indices = @transform_2, window_bounds = array<i64: 4, 8, 128>}, {transform_indices = @transform_3, window_bounds = array<i64: 4, 8, 128>}, {transform_indices = @transform_4, window_bounds = array<i64: 1, 8, 128>}, {transform_indices = @transform_5, window_bounds = array<i64: 1, 8, 128>}]} {
    %cst = arith.constant 0.000000e+00 : f32
    %0 = vector.broadcast %cst : f32 to vector<8x128xf32>
    %cst_0 = arith.constant 0.000000e+00 : f32
    %1 = vector.broadcast %cst_0 : f32 to vector<8x128xf32>
    %c0 = arith.constant 0 : index
    %c0_1 = arith.constant 0 : index
    %c0_2 = arith.constant 0 : index
    %2 = vector.load %arg3[%c0, %c0_1, %c0_2] : memref<1x4x128xf32, #tpu.memory_space<vmem>>, vector<1x1x128xf32>
    %3 = vector.shape_cast %2 : vector<1x1x128xf32> to vector<1x128xf32>
    %4 = vector.shape_cast %3 : vector<1x128xf32> to vector<1x128xf32>
    %5 = vector.broadcast %4 : vector<1x128xf32> to vector<8x128xf32>
    %c0_3 = arith.constant 0 : index
    %c0_4 = arith.constant 0 : index
    %c0_5 = arith.constant 0 : index
    %6 = vector.load %arg4[%c0_3, %c0_4, %c0_5] : memref<1x4x128xf32, #tpu.memory_space<vmem>>, vector<1x1x128xf32>
    %7 = vector.shape_cast %6 : vector<1x1x128xf32> to vector<1x128xf32>
    %8 = vector.shape_cast %7 : vector<1x128xf32> to vector<1x128xf32>
    %9 = vector.broadcast %8 : vector<1x128xf32> to vector<8x128xf32>
    %c0_6 = arith.constant 0 : index
    %c0_7 = arith.constant 0 : index
    %c0_8 = arith.constant 0 : index
    %10 = vector.load %arg5[%c0_6, %c0_7, %c0_8] : memref<4x8x128xf32, #tpu.memory_space<vmem>>, vector<1x8x128xf32>
    %11 = vector.shape_cast %10 : vector<1x8x128xf32> to vector<8x128xf32>
    %c0_9 = arith.constant 0 : index
    %c0_10 = arith.constant 0 : index
    %c0_11 = arith.constant 0 : index
    %12 = vector.load %arg6[%c0_9, %c0_10, %c0_11] : memref<4x8x128xf32, #tpu.memory_space<vmem>>, vector<1x8x128xf32>
    %13 = vector.shape_cast %12 : vector<1x8x128xf32> to vector<8x128xf32>
    %14 = arith.mulf %5, %11 : vector<8x128xf32>
    %15 = arith.mulf %9, %13 : vector<8x128xf32>
    %16 = arith.subf %14, %15 : vector<8x128xf32>
    %17 = arith.addf %0, %16 : vector<8x128xf32>
    %18 = arith.mulf %5, %13 : vector<8x128xf32>
    %19 = arith.mulf %9, %11 : vector<8x128xf32>
    %20 = arith.addf %18, %19 : vector<8x128xf32>
    %21 = arith.addf %1, %20 : vector<8x128xf32>
    %c0_12 = arith.constant 0 : index
    %c1 = arith.constant 1 : index
    %c0_13 = arith.constant 0 : index
    %22 = vector.load %arg3[%c0_12, %c1, %c0_13] : memref<1x4x128xf32, #tpu.memory_space<vmem>>, vector<1x1x128xf32>
    %23 = vector.shape_cast %22 : vector<1x1x128xf32> to vector<1x128xf32>
    %24 = vector.shape_cast %23 : vector<1x128xf32> to vector<1x128xf32>
    %25 = vector.broadcast %24 : vector<1x128xf32> to vector<8x128xf32>
    %c0_14 = arith.constant 0 : index
    %c1_15 = arith.constant 1 : index
    %c0_16 = arith.constant 0 : index
    %26 = vector.load %arg4[%c0_14, %c1_15, %c0_16] : memref<1x4x128xf32, #tpu.memory_space<vmem>>, vector<1x1x128xf32>
    %27 = vector.shape_cast %26 : vector<1x1x128xf32> to vector<1x128xf32>
    %28 = vector.shape_cast %27 : vector<1x128xf32> to vector<1x128xf32>
    %29 = vector.broadcast %28 : vector<1x128xf32> to vector<8x128xf32>
    %c1_17 = arith.constant 1 : index
    %c0_18 = arith.constant 0 : index
    %c0_19 = arith.constant 0 : index
    %30 = vector.load %arg5[%c1_17, %c0_18, %c0_19] : memref<4x8x128xf32, #tpu.memory_space<vmem>>, vector<1x8x128xf32>
    %31 = vector.shape_cast %30 : vector<1x8x128xf32> to vector<8x128xf32>
    %c1_20 = arith.constant 1 : index
    %c0_21 = arith.constant 0 : index
    %c0_22 = arith.constant 0 : index
    %32 = vector.load %arg6[%c1_20, %c0_21, %c0_22] : memref<4x8x128xf32, #tpu.memory_space<vmem>>, vector<1x8x128xf32>
    %33 = vector.shape_cast %32 : vector<1x8x128xf32> to vector<8x128xf32>
    %34 = arith.mulf %25, %31 : vector<8x128xf32>
    %35 = arith.mulf %29, %33 : vector<8x128xf32>
    %36 = arith.subf %34, %35 : vector<8x128xf32>
    %37 = arith.addf %17, %36 : vector<8x128xf32>
    %38 = arith.mulf %25, %33 : vector<8x128xf32>
    %39 = arith.mulf %29, %31 : vector<8x128xf32>
    %40 = arith.addf %38, %39 : vector<8x128xf32>
    %41 = arith.addf %21, %40 : vector<8x128xf32>
    %c0_23 = arith.constant 0 : index
    %c2 = arith.constant 2 : index
    %c0_24 = arith.constant 0 : index
    %42 = vector.load %arg3[%c0_23, %c2, %c0_24] : memref<1x4x128xf32, #tpu.memory_space<vmem>>, vector<1x1x128xf32>
    %43 = vector.shape_cast %42 : vector<1x1x128xf32> to vector<1x128xf32>
    %44 = vector.shape_cast %43 : vector<1x128xf32> to vector<1x128xf32>
    %45 = vector.broadcast %44 : vector<1x128xf32> to vector<8x128xf32>
    %c0_25 = arith.constant 0 : index
    %c2_26 = arith.constant 2 : index
    %c0_27 = arith.constant 0 : index
    %46 = vector.load %arg4[%c0_25, %c2_26, %c0_27] : memref<1x4x128xf32, #tpu.memory_space<vmem>>, vector<1x1x128xf32>
    %47 = vector.shape_cast %46 : vector<1x1x128xf32> to vector<1x128xf32>
    %48 = vector.shape_cast %47 : vector<1x128xf32> to vector<1x128xf32>
    %49 = vector.broadcast %48 : vector<1x128xf32> to vector<8x128xf32>
    %c2_28 = arith.constant 2 : index
    %c0_29 = arith.constant 0 : index
    %c0_30 = arith.constant 0 : index
    %50 = vector.load %arg5[%c2_28, %c0_29, %c0_30] : memref<4x8x128xf32, #tpu.memory_space<vmem>>, vector<1x8x128xf32>
    %51 = vector.shape_cast %50 : vector<1x8x128xf32> to vector<8x128xf32>
    %c2_31 = arith.constant 2 : index
    %c0_32 = arith.constant 0 : index
    %c0_33 = arith.constant 0 : index
    %52 = vector.load %arg6[%c2_31, %c0_32, %c0_33] : memref<4x8x128xf32, #tpu.memory_space<vmem>>, vector<1x8x128xf32>
    %53 = vector.shape_cast %52 : vector<1x8x128xf32> to vector<8x128xf32>
    %54 = arith.mulf %45, %51 : vector<8x128xf32>
    %55 = arith.mulf %49, %53 : vector<8x128xf32>
    %56 = arith.subf %54, %55 : vector<8x128xf32>
    %57 = arith.addf %37, %56 : vector<8x128xf32>
    %58 = arith.mulf %45, %53 : vector<8x128xf32>
    %59 = arith.mulf %49, %51 : vector<8x128xf32>
    %60 = arith.addf %58, %59 : vector<8x128xf32>
    %61 = arith.addf %41, %60 : vector<8x128xf32>
    %c0_34 = arith.constant 0 : index
    %c3 = arith.constant 3 : index
    %c0_35 = arith.constant 0 : index
    %62 = vector.load %arg3[%c0_34, %c3, %c0_35] : memref<1x4x128xf32, #tpu.memory_space<vmem>>, vector<1x1x128xf32>
    %63 = vector.shape_cast %62 : vector<1x1x128xf32> to vector<1x128xf32>
    %64 = vector.shape_cast %63 : vector<1x128xf32> to vector<1x128xf32>
    %65 = vector.broadcast %64 : vector<1x128xf32> to vector<8x128xf32>
    %c0_36 = arith.constant 0 : index
    %c3_37 = arith.constant 3 : index
    %c0_38 = arith.constant 0 : index
    %66 = vector.load %arg4[%c0_36, %c3_37, %c0_38] : memref<1x4x128xf32, #tpu.memory_space<vmem>>, vector<1x1x128xf32>
    %67 = vector.shape_cast %66 : vector<1x1x128xf32> to vector<1x128xf32>
    %68 = vector.shape_cast %67 : vector<1x128xf32> to vector<1x128xf32>
    %69 = vector.broadcast %68 : vector<1x128xf32> to vector<8x128xf32>
    %c3_39 = arith.constant 3 : index
    %c0_40 = arith.constant 0 : index
    %c0_41 = arith.constant 0 : index
    %70 = vector.load %arg5[%c3_39, %c0_40, %c0_41] : memref<4x8x128xf32, #tpu.memory_space<vmem>>, vector<1x8x128xf32>
    %71 = vector.shape_cast %70 : vector<1x8x128xf32> to vector<8x128xf32>
    %c3_42 = arith.constant 3 : index
    %c0_43 = arith.constant 0 : index
    %c0_44 = arith.constant 0 : index
    %72 = vector.load %arg6[%c3_42, %c0_43, %c0_44] : memref<4x8x128xf32, #tpu.memory_space<vmem>>, vector<1x8x128xf32>
    %73 = vector.shape_cast %72 : vector<1x8x128xf32> to vector<8x128xf32>
    %74 = arith.mulf %65, %71 : vector<8x128xf32>
    %75 = arith.mulf %69, %73 : vector<8x128xf32>
    %76 = arith.subf %74, %75 : vector<8x128xf32>
    %77 = arith.addf %57, %76 : vector<8x128xf32>
    %78 = arith.mulf %65, %73 : vector<8x128xf32>
    %79 = arith.mulf %69, %71 : vector<8x128xf32>
    %80 = arith.addf %78, %79 : vector<8x128xf32>
    %81 = arith.addf %61, %80 : vector<8x128xf32>
    %c0_45 = arith.constant 0 : index
    %c0_46 = arith.constant 0 : index
    %c0_47 = arith.constant 0 : index
    %82 = vector.load %arg7[%c0_45, %c0_46, %c0_47] : memref<1x8x128xf32, #tpu.memory_space<vmem>>, vector<1x8x128xf32>
    %83 = vector.shape_cast %82 : vector<1x8x128xf32> to vector<8x128xf32>
    %84 = vector.shape_cast %77 : vector<8x128xf32> to vector<1x8x128xf32>
    tpu.vector_store %arg7[%c0_45, %c0_46, %c0_47], %84 {strides = array<i32>} : memref<1x8x128xf32, #tpu.memory_space<vmem>>, vector<1x8x128xf32>,
    %c0_48 = arith.constant 0 : index
    %c0_49 = arith.constant 0 : index
    %c0_50 = arith.constant 0 : index
    %85 = vector.load %arg8[%c0_48, %c0_49, %c0_50] : memref<1x8x128xf32, #tpu.memory_space<vmem>>, vector<1x8x128xf32>
    %86 = vector.shape_cast %85 : vector<1x8x128xf32> to vector<8x128xf32>
    %87 = vector.shape_cast %81 : vector<8x128xf32> to vector<1x8x128xf32>
    tpu.vector_store %arg8[%c0_48, %c0_49, %c0_50], %87 {strides = array<i32>} : memref<1x8x128xf32, #tpu.memory_space<vmem>>, vector<1x8x128xf32>,
    return
  }
  func.func @transform_0(%arg0: i32, %arg1: i32, %arg2: i32) -> (i32, i32, i32) {
    %c0_i32 = arith.constant 0 : i32
    %c0_i32_0 = arith.constant 0 : i32
    return %arg2, %c0_i32, %arg1 : i32, i32, i32
  }
  func.func @transform_1(%arg0: i32, %arg1: i32, %arg2: i32) -> (i32, i32, i32) {
    %c0_i32 = arith.constant 0 : i32
    %c0_i32_0 = arith.constant 0 : i32
    return %arg2, %c0_i32, %arg1 : i32, i32, i32
  }
  func.func @transform_2(%arg0: i32, %arg1: i32, %arg2: i32) -> (i32, i32, i32) {
    %c0_i32 = arith.constant 0 : i32
    %c0_i32_0 = arith.constant 0 : i32
    return %c0_i32, %arg0, %arg1 : i32, i32, i32
  }
  func.func @transform_3(%arg0: i32, %arg1: i32, %arg2: i32) -> (i32, i32, i32) {
    %c0_i32 = arith.constant 0 : i32
    %c0_i32_0 = arith.constant 0 : i32
    return %c0_i32, %arg0, %arg1 : i32, i32, i32
  }
  func.func @transform_4(%arg0: i32, %arg1: i32, %arg2: i32) -> (i32, i32, i32) {
    %c0_i32 = arith.constant 0 : i32
    return %arg2, %arg0, %arg1 : i32, i32, i32
  }
  func.func @transform_5(%arg0: i32, %arg1: i32, %arg2: i32) -> (i32, i32, i32) {
    %c0_i32 = arith.constant 0 : i32
    return %arg2, %arg0, %arg1 : i32, i32, i32
  }
}

</mosaic_0001>

<llo_original>
// kernel: tpu_custom_call.1
$region0: #{tpu_custom_call.1}
  #allocation0 [shape = 'u32[]', space=smem, size = 0x4, offset = 0x4, fixed_abs, tag = 'smem constant byte address 0x4 - core index']
  #allocation1 [shape = 'u32[144,128]{1,0:T(1,128)}', space=vmem, size = 0x12000, scoped, tag = 'internal scratch']
  %s0 = inlined_call_operand.hbm [shape: f32[2,4,128], index: 0, kind: input, shape index: {}]
  %s1 = inlined_call_operand.hbm [shape: f32[2,4,128], index: 1, kind: input, shape index: {}]
  %s2 = inlined_call_operand.hbm [shape: f32[4,8,128], index: 2, kind: input, shape index: {}]
  %s3 = inlined_call_operand.hbm [shape: f32[4,8,128], index: 3, kind: input, shape index: {}]
  %s4 = inlined_call_operand.hbm [shape: f32[2,8,128], index: 4, kind: output, shape index: {0}]
  %s5 = inlined_call_operand.hbm [shape: f32[2,8,128], index: 5, kind: output, shape index: {1}]
  %6 = xla_tuple %s4, %s5
  %s7 = sld [smem:[#allocation0]]
  $region73: #{tpu_custom_call.1} parent=0
    _
  %s9 = ssub.s32 1, %s7
  %s10 = scalar_select 0, %s9, %s7
  $region1: #{tpu_custom_call.1} parent=0
    #allocation2 [shape = 'u8[4096]{0}', space=vmem, size = 0x1000, scoped, tag = 'input window, operand 0']
    #allocation3 [shape = 's32[2]{0}', space=sflag, size = 0x8, scoped, tag = 'scoped memory for tpu_custom_call.1']
    #allocation4 [shape = 's32[2]{0}', space=sflag, size = 0x8, scoped, tag = 'scoped memory for tpu_custom_call.1']
    #allocation5 [shape = 'u8[4096]{0}', space=vmem, size = 0x1000, scoped, tag = 'input window, operand 1']
    #allocation6 [shape = 's32[2]{0}', space=sflag, size = 0x8, scoped, tag = 'scoped memory for tpu_custom_call.1']
    #allocation7 [shape = 'u8[16384]{0}', space=vmem, size = 0x4000, scoped, tag = 'input window, operand 2, single buffered']
    #allocation8 [shape = 'u8[16384]{0}', space=vmem, size = 0x4000, scoped, tag = 'input window, operand 3, single buffered']
    #allocation9 [shape = 's32[1]{0}', space=sflag, size = 0x4, scoped, tag = 'scoped memory for tpu_custom_call.1']
    #allocation10 [shape = 'u8[8192]{0}', space=vmem, size = 0x2000, scoped, tag = 'output window, operand 0']
    #allocation11 [shape = 'u8[8192]{0}', space=vmem, size = 0x2000, scoped, tag = 'output window, operand 1']
    #allocation12 [shape = 's32[2]{0}', space=sflag, size = 0x8, scoped, tag = 'scoped memory for tpu_custom_call.1']
    %11 = vsyncpa [#allocation3], 0
    %s12 = scalar_lea.sflag [#allocation3], 1
    %13 = vsyncpa %s12, 0
    %14 = vsyncpa [#allocation6], 0
    %s15 = scalar_lea.sflag [#allocation6], 1
    %16 = vsyncpa %s15, 0
    %17 = vsyncpa [#allocation9], 0
    %18 = vsyncpa [#allocation4], 0
    %s19 = scalar_lea.sflag [#allocation4], 1
    %20 = vsyncpa %s19, 0
    %21 = vsyncpa [#allocation12], 0
    %s22 = scalar_lea.sflag [#allocation12], 1
    %23 = vsyncpa %s22, 0
    loop: start=0, step=1, limit=4
    $region2: #{tpu_custom_call.1} parent=1 // loop_pre_header
      _
    $region3: #{tpu_custom_call.1} parent=1 // loop_header
      %s25 = sphi 0, %s29
      %p26 = scmp.ge.s32.totalorder %s25, 4
      %s32 = sphi 0, %s51
      %s33 = sphi 0, %s47
      %s34 = sphi 0, %s43
      %s35 = sphi 0, %s32
      %s36 = sphi 0, %s33
      %s37 = sphi 0, %s34
      %s38 = sphi 0, %s35
      %s39 = sphi 0, %s36
      %s40 = sphi 0, %s37
      %s56 = sphi 0, %s58
      %s59 = sphi 0, %s56
      %s60 = sphi 0, %s59
      %s76 = sphi 0, %s60
      %s84 = sphi 0, %s86
      %s87 = sphi 0, %s84
      %s88 = sphi 0, %s87
      %s104 = sphi 0, %s88
      %s112 = sphi 0, %s114
      %s115 = sphi 0, %s112
      %s116 = sphi 0, %s115
      %s132 = sphi 0, %s116
      %s140 = sphi 0, %s142
      %s143 = sphi 0, %s140
      %s144 = sphi 0, %s143
      %s160 = sphi 0, %s144
      %s170 = sphi 0, %s172
      %s173 = sphi 0, %s170
      %s174 = sphi 0, %s173
      %s190 = sphi 0, %s174
      %s200 = sphi 0, %s202
      %s203 = sphi 0, %s200
      %s204 = sphi 0, %s203
      %s220 = sphi 0, %s204
    $region4: #{tpu_custom_call.1} parent=1 // loop_header_branch
      %28 = sbr.rel (%p26) target = $region8
    $region5: #{tpu_custom_call.1} parent=1 // loop_body
      %s30 = ssub.s32 %s25, 1
      %s31 = ssub.s32 %s25, 2
      %s41 = sadd.s32 1, %s34
      %p42 = scmp.ge.s32.totalorder %s41, 2
      %s43 = scalar_select %p42, 0, %s41
      %s44 = sadd.s32 1, %s33
      %s45 = scalar_select %p42, %s44, %s33
      %p46 = scmp.ge.s32.totalorder %s45, 1
      %s47 = scalar_select %p46, 0, %s45
      %s48 = sadd.s32 1, %s32
      %s49 = scalar_select %p46, %s48, %s32
      %p50 = scmp.ge.s32.totalorder %s49, 1
      %s51 = scalar_select %p50, 0, %s49
      %s52 = ssub.s32 %s34, %s43
      %s53 = ssub.s32 %s33, %s47
      %s54 = sor.u32 %s52, %s53
      %p55 = scmp.eq.s32.totalorder %s54, 0
      %s57 = sadd.s32 %s56, 1
      %s58 = scalar_select %p55, %s56, %s57
      %p61 = pneg %p55
      %p62 = scmp.eq.s32.totalorder %s25, 1
      %p63 = por %p61, %p62
      %p64 = scmp.ne.s32.totalorder %s56, %s59
      %p65 = scmp.eq.s32.totalorder %s25, 0
      %p66 = por %p64, %p65
      %p67 = scmp.ne.s32.totalorder %s56, %s59
      %p68 = scmp.eq.s32.totalorder %s30, 1
      %p69 = por %p67, %p68
      %p70 = scmp.ne.s32.totalorder %s59, %s60
      %p71 = scmp.eq.s32.totalorder %s30, 0
      %p72 = por %p70, %p71
      %p73 = scmp.ne.s32.totalorder %s59, %s60
      %p74 = scmp.eq.s32.totalorder %s31, 1
      %p75 = por %p73, %p74
      %p77 = scmp.ne.s32.totalorder %s60, %s76
      %p78 = scmp.eq.s32.totalorder %s31, 0
      %p79 = por %p77, %p78
      %s80 = ssub.s32 %s34, %s43
      %s81 = ssub.s32 %s33, %s47
      %s82 = sor.u32 %s80, %s81
      %p83 = scmp.eq.s32.totalorder %s82, 0
      %s85 = sadd.s32 %s84, 1
      %s86 = scalar_select %p83, %s84, %s85
      %p89 = pneg %p83
      %p90 = scmp.eq.s32.totalorder %s25, 1
      %p91 = por %p89, %p90
      %p92 = scmp.ne.s32.totalorder %s84, %s87
      %p93 = scmp.eq.s32.totalorder %s25, 0
      %p94 = por %p92, %p93
      %p95 = scmp.ne.s32.totalorder %s84, %s87
      %p96 = scmp.eq.s32.totalorder %s30, 1
      %p97 = por %p95, %p96
      %p98 = scmp.ne.s32.totalorder %s87, %s88
      %p99 = scmp.eq.s32.totalorder %s30, 0
      %p100 = por %p98, %p99
      %p101 = scmp.ne.s32.totalorder %s87, %s88
      %p102 = scmp.eq.s32.totalorder %s31, 1
      %p103 = por %p101, %p102
      %p105 = scmp.ne.s32.totalorder %s88, %s104
      %p106 = scmp.eq.s32.totalorder %s31, 0
      %p107 = por %p105, %p106
      %s108 = ssub.s32 %s32, %s51
      %s109 = ssub.s32 %s33, %s47
      %s110 = sor.u32 %s108, %s109
      %p111 = scmp.eq.s32.totalorder %s110, 0
      %s113 = sadd.s32 %s112, 1
      %s114 = scalar_select %p111, %s112, %s113
      %p117 = pneg %p111
      %p118 = scmp.eq.s32.totalorder %s25, 1
      %p119 = por %p117, %p118
      %p120 = scmp.ne.s32.totalorder %s112, %s115
      %p121 = scmp.eq.s32.totalorder %s25, 0
      %p122 = por %p120, %p121
      %p123 = scmp.ne.s32.totalorder %s112, %s115
      %p124 = scmp.eq.s32.totalorder %s30, 1
      %p125 = por %p123, %p124
      %p126 = scmp.ne.s32.totalorder %s115, %s116
      %p127 = scmp.eq.s32.totalorder %s30, 0
      %p128 = por %p126, %p127
      %p129 = scmp.ne.s32.totalorder %s115, %s116
      %p130 = scmp.eq.s32.totalorder %s31, 1
      %p131 = por %p129, %p130
      %p133 = scmp.ne.s32.totalorder %s116, %s132
      %p134 = scmp.eq.s32.totalorder %s31, 0
      %p135 = por %p133, %p134
      %s136 = ssub.s32 %s32, %s51
      %s137 = ssub.s32 %s33, %s47
      %s138 = sor.u32 %s136, %s137
      %p139 = scmp.eq.s32.totalorder %s138, 0
      %s141 = sadd.s32 %s140, 1
      %s142 = scalar_select %p139, %s140, %s141
      %p145 = pneg %p139
      %p146 = scmp.eq.s32.totalorder %s25, 1
      %p147 = por %p145, %p146
      %p148 = scmp.ne.s32.totalorder %s140, %s143
      %p149 = scmp.eq.s32.totalorder %s25, 0
      %p150 = por %p148, %p149
      %p151 = scmp.ne.s32.totalorder %s140, %s143
      %p152 = scmp.eq.s32.totalorder %s30, 1
      %p153 = por %p151, %p152
      %p154 = scmp.ne.s32.totalorder %s143, %s144
      %p155 = scmp.eq.s32.totalorder %s30, 0
      %p156 = por %p154, %p155
      %p157 = scmp.ne.s32.totalorder %s143, %s144
      %p158 = scmp.eq.s32.totalorder %s31, 1
      %p159 = por %p157, %p158
      %p161 = scmp.ne.s32.totalorder %s144, %s160
      %p162 = scmp.eq.s32.totalorder %s31, 0
      %p163 = por %p161, %p162
      %s164 = ssub.s32 %s34, %s43
      %s165 = ssub.s32 %s32, %s51
      %s166 = sor.u32 %s164, %s165
      %s167 = ssub.s32 %s33, %s47
      %s168 = sor.u32 %s166, %s167
      %p169 = scmp.eq.s32.totalorder %s168, 0
      %s171 = sadd.s32 %s170, 1
      %s172 = scalar_select %p169, %s170, %s171
      %p175 = pneg %p169
      %p176 = scmp.eq.s32.totalorder %s25, 1
      %p177 = por %p175, %p176
      %p178 = scmp.ne.s32.totalorder %s170, %s173
      %p179 = scmp.eq.s32.totalorder %s25, 0
      %p180 = por %p178, %p179
      %p181 = scmp.ne.s32.totalorder %s170, %s173
      %p182 = scmp.eq.s32.totalorder %s30, 1
      %p183 = por %p181, %p182
      %p184 = scmp.ne.s32.totalorder %s173, %s174
      %p185 = scmp.eq.s32.totalorder %s30, 0
      %p186 = por %p184, %p185
      %p187 = scmp.ne.s32.totalorder %s173, %s174
      %p188 = scmp.eq.s32.totalorder %s31, 1
      %p189 = por %p187, %p188
      %p191 = scmp.ne.s32.totalorder %s174, %s190
      %p192 = scmp.eq.s32.totalorder %s31, 0
      %p193 = por %p191, %p192
      %s194 = ssub.s32 %s34, %s43
      %s195 = ssub.s32 %s32, %s51
      %s196 = sor.u32 %s194, %s195
      %s197 = ssub.s32 %s33, %s47
      %s198 = sor.u32 %s196, %s197
      %p199 = scmp.eq.s32.totalorder %s198, 0
      %s201 = sadd.s32 %s200, 1
      %s202 = scalar_select %p199, %s200, %s201
      %p205 = pneg %p199
      %p206 = scmp.eq.s32.totalorder %s25, 1
      %p207 = por %p205, %p206
      %p208 = scmp.ne.s32.totalorder %s200, %s203
      %p209 = scmp.eq.s32.totalorder %s25, 0
      %p210 = por %p208, %p209
      %p211 = scmp.ne.s32.totalorder %s200, %s203
      %p212 = scmp.eq.s32.totalorder %s30, 1
      %p213 = por %p211, %p212
      %p214 = scmp.ne.s32.totalorder %s203, %s204
      %p215 = scmp.eq.s32.totalorder %s30, 0
      %p216 = por %p214, %p215
      %p217 = scmp.ne.s32.totalorder %s203, %s204
      %p218 = scmp.eq.s32.totalorder %s31, 1
      %p219 = por %p217, %p218
      %p221 = scmp.ne.s32.totalorder %s204, %s220
      %p222 = scmp.eq.s32.totalorder %s31, 0
      %p223 = por %p221, %p222
      %p224 = scmp.le.s32.totalorder 1, %s25
      %p225 = scmp.lt.s32.totalorder %s25, 3
      %p226 = pnand %p224, %p225
      %p227 = pneg %p226
      // Predicated region
      $region9: #{tpu_custom_call.1} parent=5 // pred_check
        _
      $region10: #{tpu_custom_call.1} parent=5 // pred_check_branch
        %229 = sbr.rel (%p226) target = $region12
      $region11: #{tpu_custom_call.1} parent=5 // pred_region
        %s230 = ssub.s32 %s25, 1
        // Predicated region
        $region13: #{tpu_custom_call.1} parent=11 // pred_check
          %p231 = pneg %p128
        $region14: #{tpu_custom_call.1} parent=11 // pred_check_branch
          %233 = sbr.rel (%p231) target = $region16
        $region15: #{tpu_custom_call.1} parent=11 // pred_region
          %s235 = ssub.s32 512, 512
          %236 = vsyncadd [#allocation6], %s235
          %s237 = sadd.s32 %s36, %s35
          %s238 = smul.addr %s237, 128
          %s239 = scalar_lea.hbm %s2, %s238
          %s240 = sshll.u32 [#allocation7], 4
          %s241 = int_to_ptr.vmem [resolvable:$true] %s240
          %246 = dma.hbm_to_vmem [thread:$0]  %s239, 512, %s241, [#allocation6], 128, 128, 8
        $region16: #{tpu_custom_call.1} parent=11 // pred_fallthru
          _
        // Predicated region
        $region17: #{tpu_custom_call.1} parent=11 // pred_check
          %p247 = pneg %p156
        $region18: #{tpu_custom_call.1} parent=11 // pred_check_branch
          %249 = sbr.rel (%p247) target = $region20
        $region19: #{tpu_custom_call.1} parent=11 // pred_region
          %s251 = ssub.s32 512, 512
          %252 = vsyncadd [#allocation9], %s251
          %s253 = sadd.s32 %s36, %s35
          %s254 = smul.addr %s253, 128
          %s255 = scalar_lea.hbm %s3, %s254
          %s256 = sshll.u32 [#allocation8], 4
          %s257 = int_to_ptr.vmem [resolvable:$true] %s256
          %262 = dma.hbm_to_vmem [thread:$0]  %s255, 512, %s257, [#allocation9], 128, 128, 8
        $region20: #{tpu_custom_call.1} parent=11 // pred_fallthru
          _
      $region12: #{tpu_custom_call.1} parent=5 // pred_fallthru
        _
      %p263 = scmp.lt.s32.totalorder %s25, 2
      // Predicated region
      $region21: #{tpu_custom_call.1} parent=5 // pred_check
        %p264 = pneg %p263
      $region22: #{tpu_custom_call.1} parent=5 // pred_check_branch
        %266 = sbr.rel (%p264) target = $region24
      $region23: #{tpu_custom_call.1} parent=5 // pred_region
        // Predicated region
        $region25: #{tpu_custom_call.1} parent=23 // pred_check
          %p267 = pneg %p66
        $region26: #{tpu_custom_call.1} parent=23 // pred_check_branch
          %269 = sbr.rel (%p267) target = $region28
        $region27: #{tpu_custom_call.1} parent=23 // pred_region
          %s270 = sand.u32 %s56, 1
          %s271 = scalar_lea.sflag [#allocation3], %s270
          %s272 = sand.u32 %s56, 1
          %s273 = smul.addr %s272, 4
          %s274 = scalar_lea.vmem [#allocation2], %s273
          %s276 = ssub.s32 64, 64
          %277 = vsyncadd %s271, %s276
          %s278 = sadd.s32 %s33, %s34
          %s279 = smul.addr %s278, 64
          %s280 = scalar_lea.hbm %s0, %s279
          %s282 = sshll.u32 %s274, 4
          %s283 = int_to_ptr.vmem [resolvable:$true] %s282
          %285 = dma.hbm_to_vmem [thread:$0]  %s280, 64, %s283, %s271
        $region28: #{tpu_custom_call.1} parent=23 // pred_fallthru
          _
        // Predicated region
        $region29: #{tpu_custom_call.1} parent=23 // pred_check
          %p286 = pneg %p94
        $region30: #{tpu_custom_call.1} parent=23 // pred_check_branch
          %288 = sbr.rel (%p286) target = $region32
        $region31: #{tpu_custom_call.1} parent=23 // pred_region
          %s289 = sand.u32 %s25, 1
          %s290 = scalar_lea.sflag [#allocation6], %s289
          %s291 = sand.u32 %s84, 1
          %s292 = smul.addr %s291, 4
          %s293 = scalar_lea.vmem [#allocation5], %s292
          %s295 = ssub.s32 64, 64
          %296 = vsyncadd %s290, %s295
          %s297 = sadd.s32 %s33, %s34
          %s298 = smul.addr %s297, 64
          %s299 = scalar_lea.hbm %s1, %s298
          %s301 = sshll.u32 %s293, 4
          %s302 = int_to_ptr.vmem [resolvable:$true] %s301
          %304 = dma.hbm_to_vmem [thread:$0]  %s299, 64, %s302, %s290
        $region32: #{tpu_custom_call.1} parent=23 // pred_fallthru
          _
      $region24: #{tpu_custom_call.1} parent=5 // pred_fallthru
        _
      %p305 = scmp.le.s32.totalorder 1, %s25
      %p306 = scmp.lt.s32.totalorder %s25, 3
      %p307 = pnand %p305, %p306
      %p308 = pneg %p307
      // Predicated region
      $region33: #{tpu_custom_call.1} parent=5 // pred_check
        _
      $region34: #{tpu_custom_call.1} parent=5 // pred_check_branch
        %310 = sbr.rel (%p307) target = $region36
      $region35: #{tpu_custom_call.1} parent=5 // pred_region
        %s311 = ssub.s32 %s25, 1
        %s312 = sand.u32 %s59, 1
        %s313 = scalar_lea.sflag [#allocation3], %s312
        %s314 = sand.u32 %s59, 1
        %s315 = smul.addr %s314, 4
        %s316 = scalar_lea.vmem [#allocation2], %s315
        // Predicated region
        $region37: #{tpu_custom_call.1} parent=35 // pred_check
          %p317 = pneg %p72
        $region38: #{tpu_custom_call.1} parent=35 // pred_check_branch
          %319 = sbr.rel (%p317) target = $region40
        $region39: #{tpu_custom_call.1} parent=35 // pred_region
          %320 = dma.done %s313, 64
        $region40: #{tpu_custom_call.1} parent=35 // pred_fallthru
          _
        %s321 = sand.u32 %s30, 1
        %s322 = scalar_lea.sflag [#allocation6], %s321
        %s323 = sand.u32 %s87, 1
        %s324 = smul.addr %s323, 4
        %s325 = scalar_lea.vmem [#allocation5], %s324
        // Predicated region
        $region41: #{tpu_custom_call.1} parent=35 // pred_check
          %p326 = pneg %p100
        $region42: #{tpu_custom_call.1} parent=35 // pred_check_branch
          %328 = sbr.rel (%p326) target = $region44
        $region43: #{tpu_custom_call.1} parent=35 // pred_region
          %329 = dma.done %s322, 64
        $region44: #{tpu_custom_call.1} parent=35 // pred_fallthru
          _
        // Predicated region
        $region45: #{tpu_custom_call.1} parent=35 // pred_check
          %p330 = pneg %p128
        $region46: #{tpu_custom_call.1} parent=35 // pred_check_branch
          %332 = sbr.rel (%p330) target = $region48
        $region47: #{tpu_custom_call.1} parent=35 // pred_region
          %333 = dma.done [#allocation6], 512
        $region48: #{tpu_custom_call.1} parent=35 // pred_fallthru
          _
        // Predicated region
        $region49: #{tpu_custom_call.1} parent=35 // pred_check
          %p334 = pneg %p156
        $region50: #{tpu_custom_call.1} parent=35 // pred_check_branch
          %336 = sbr.rel (%p334) target = $region52
        $region51: #{tpu_custom_call.1} parent=35 // pred_region
          %337 = dma.done [#allocation9], 512
        $region52: #{tpu_custom_call.1} parent=35 // pred_fallthru
          _
        %s338 = sand.u32 %s59, 1
        %s339 = scalar_lea.sflag [#allocation3], %s338
        %s340 = sand.u32 %s59, 1
        %s341 = smul.addr %s340, 4
        %s342 = scalar_lea.vmem [#allocation2], %s341
        %p343 = pneg %p72
        %p344 = pneg %p69
        %s345 = sand.u32 %s30, 1
        %s346 = scalar_lea.sflag [#allocation6], %s345
        %s347 = sand.u32 %s87, 1
        %s348 = smul.addr %s347, 4
        %s349 = scalar_lea.vmem [#allocation5], %s348
        %p350 = pneg %p100
        %p351 = pneg %p97
        %p352 = pneg %p128
        %p353 = pneg %p125
        %p354 = pneg %p156
        %p355 = pneg %p153
        %p356 = pneg %p186
        %p357 = pneg %p183
        %s358 = sand.u32 %s173, 1
        %s359 = scalar_lea.sflag [#allocation4], %s358
        %s360 = sand.u32 %s173, 1
        %s361 = smul.addr %s360, 8
        %s362 = scalar_lea.vmem [#allocation10], %s361
        %p363 = pneg %p216
        %p364 = pneg %p213
        %s365 = sand.u32 %s203, 1
        %s366 = scalar_lea.sflag [#allocation12], %s365
        %s367 = sand.u32 %s203, 1
        %s368 = smul.addr %s367, 8
        %s369 = scalar_lea.vmem [#allocation11], %s368
        %v370 = vld [vmem:[%s316] sm:$0x1]
        %v371 = vlaneseq
        %v372 = vshrl.u32 %v371, 7
        %v373 = vsub.s32 0, %v372
        %v374 = vrot.slane %v370, %v373
        %v375 = vld [vmem:[%s325] sm:$0x1]
        %v376 = vlaneseq
        %v377 = vshrl.u32 %v376, 7
        %v378 = vsub.s32 0, %v377
        %v379 = vrot.slane %v375, %v378
        %v380 = vld [vmem:[#allocation7] sm:$0xff]
        %v381 = vld [vmem:[#allocation8] sm:$0xff]
        %v382 = vmul.f32 %v374, %v380
        %v383 = vmul.f32 %v379, %v381
        %v384 = vsub.f32 %v382, %v383
        %v385 = vadd.f32 %v384, 0.0
        %v386 = vmul.f32 %v374, %v381
        %v387 = vmul.f32 %v379, %v380
        %v388 = vadd.f32 %v386, %v387
        %v389 = vadd.f32 %v388, 0.0
        %v390 = vld [vmem:[%s316 + $0x1] sm:$0x1]
        %v391 = vlaneseq
        %v392 = vshrl.u32 %v391, 7
        %v393 = vsub.s32 0, %v392
        %v394 = vrot.slane %v390, %v393
        %v395 = vld [vmem:[%s325 + $0x1] sm:$0x1]
        %v396 = vlaneseq
        %v397 = vshrl.u32 %v396, 7
        %v398 = vsub.s32 0, %v397
        %v399 = vrot.slane %v395, %v398
        %s400 = scalar_lea.vmem [#allocation7], 8
        %v401 = vld [vmem:[%s400] sm:$0xff]
        %s402 = scalar_lea.vmem [#allocation8], 8
        %v403 = vld [vmem:[%s402] sm:$0xff]
        %v404 = vmul.f32 %v394, %v401
        %v405 = vmul.f32 %v399, %v403
        %v406 = vsub.f32 %v404, %v405
        %v407 = vadd.f32 %v385, %v406
        %v408 = vmul.f32 %v394, %v403
        %v409 = vmul.f32 %v399, %v401
        %v410 = vadd.f32 %v408, %v409
        %v411 = vadd.f32 %v389, %v410
        %v412 = vld [vmem:[%s316 + $0x2] sm:$0x1]
        %v413 = vlaneseq
        %v414 = vshrl.u32 %v413, 7
        %v415 = vsub.s32 0, %v414
        %v416 = vrot.slane %v412, %v415
        %v417 = vld [vmem:[%s325 + $0x2] sm:$0x1]
        %v418 = vlaneseq
        %v419 = vshrl.u32 %v418, 7
        %v420 = vsub.s32 0, %v419
        %v421 = vrot.slane %v417, %v420
        %s422 = scalar_lea.vmem [#allocation7], 16
        %v423 = vld [vmem:[%s422] sm:$0xff]
        %s424 = scalar_lea.vmem [#allocation8], 16
        %v425 = vld [vmem:[%s424] sm:$0xff]
        %v426 = vmul.f32 %v416, %v423
        %v427 = vmul.f32 %v421, %v425
        %v428 = vsub.f32 %v426, %v427
        %v429 = vadd.f32 %v407, %v428
        %v430 = vmul.f32 %v416, %v425
        %v431 = vmul.f32 %v421, %v423
        %v432 = vadd.f32 %v430, %v431
        %v433 = vadd.f32 %v411, %v432
        %v434 = vld [vmem:[%s316 + $0x3] sm:$0x1]
        %v435 = vlaneseq
        %v436 = vshrl.u32 %v435, 7
        %v437 = vsub.s32 0, %v436
        %v438 = vrot.slane %v434, %v437
        %v439 = vld [vmem:[%s325 + $0x3] sm:$0x1]
        %v440 = vlaneseq
        %v441 = vshrl.u32 %v440, 7
        %v442 = vsub.s32 0, %v441
        %v443 = vrot.slane %v439, %v442
        %s444 = scalar_lea.vmem [#allocation7], 24
        %v445 = vld [vmem:[%s444] sm:$0xff]
        %s446 = scalar_lea.vmem [#allocation8], 24
        %v447 = vld [vmem:[%s446] sm:$0xff]
        %v448 = vmul.f32 %v438, %v445
        %v449 = vmul.f32 %v443, %v447
        %v450 = vsub.f32 %v448, %v449
        %v451 = vadd.f32 %v429, %v450
        %v452 = vmul.f32 %v438, %v447
        %v453 = vmul.f32 %v443, %v445
        %v454 = vadd.f32 %v452, %v453
        %v455 = vadd.f32 %v433, %v454
        %456 = vst [vmem:[%s362] sm:$0xff] %v451
        %457 = vst [vmem:[%s369] sm:$0xff] %v455
        %s458 = sand.u32 %s173, 1
        %s459 = scalar_lea.sflag [#allocation4], %s458
        %s460 = sand.u32 %s173, 1
        %s461 = smul.addr %s460, 8
        %s462 = scalar_lea.vmem [#allocation10], %s461
        %s463 = sand.u32 %s203, 1
        %s464 = scalar_lea.sflag [#allocation12], %s463
        %s465 = sand.u32 %s203, 1
        %s466 = smul.addr %s465, 8
        %s467 = scalar_lea.vmem [#allocation11], %s466
        // Predicated region
        $region53: #{tpu_custom_call.1} parent=35 // pred_check
          %p468 = pneg %p183
        $region54: #{tpu_custom_call.1} parent=35 // pred_check_branch
          %470 = sbr.rel (%p468) target = $region56
        $region55: #{tpu_custom_call.1} parent=35 // pred_region
          %s472 = ssub.s32 128, 128
          %473 = vsyncadd %s459, %s472
          %s474 = sadd.s32 %s36, %s35
          %s475 = sadd.s32 %s474, %s37
          %s476 = smul.addr %s475, 128
          %s477 = scalar_lea.hbm %s4, %s476
          %s479 = sshll.u32 %s462, 4
          %s480 = int_to_ptr.vmem [resolvable:$true] %s479
          %482 = dma.vmem_to_hbm [thread:$0]  %s480, 128, %s477, %s459
        $region56: #{tpu_custom_call.1} parent=35 // pred_fallthru
          _
        // Predicated region
        $region57: #{tpu_custom_call.1} parent=35 // pred_check
          %p483 = pneg %p213
        $region58: #{tpu_custom_call.1} parent=35 // pred_check_branch
          %485 = sbr.rel (%p483) target = $region60
        $region59: #{tpu_custom_call.1} parent=35 // pred_region
          %s487 = ssub.s32 128, 128
          %488 = vsyncadd %s464, %s487
          %s489 = sadd.s32 %s36, %s35
          %s490 = sadd.s32 %s489, %s37
          %s491 = smul.addr %s490, 128
          %s492 = scalar_lea.hbm %s5, %s491
          %s494 = sshll.u32 %s467, 4
          %s495 = int_to_ptr.vmem [resolvable:$true] %s494
          %497 = dma.vmem_to_hbm [thread:$0]  %s495, 128, %s492, %s464
        $region60: #{tpu_custom_call.1} parent=35 // pred_fallthru
          _
      $region36: #{tpu_custom_call.1} parent=5 // pred_fallthru
        _
      %p498 = scmp.le.s32.totalorder 2, %s25
      // Predicated region
      $region61: #{tpu_custom_call.1} parent=5 // pred_check
        %p499 = pneg %p498
      $region62: #{tpu_custom_call.1} parent=5 // pred_check_branch
        %501 = sbr.rel (%p499) target = $region64
      $region63: #{tpu_custom_call.1} parent=5 // pred_region
        %s502 = ssub.s32 %s25, 2
        // Predicated region
        $region65: #{tpu_custom_call.1} parent=63 // pred_check
          %p503 = pneg %p189
        $region66: #{tpu_custom_call.1} parent=63 // pred_check_branch
          %505 = sbr.rel (%p503) target = $region68
        $region67: #{tpu_custom_call.1} parent=63 // pred_region
          %s506 = sand.u32 %s174, 1
          %s507 = scalar_lea.sflag [#allocation4], %s506
          %s508 = sand.u32 %s174, 1
          %s509 = smul.addr %s508, 8
          %s510 = scalar_lea.vmem [#allocation10], %s509
          %511 = dma.done %s507, 128
        $region68: #{tpu_custom_call.1} parent=63 // pred_fallthru
          _
        // Predicated region
        $region69: #{tpu_custom_call.1} parent=63 // pred_check
          %p512 = pneg %p219
        $region70: #{tpu_custom_call.1} parent=63 // pred_check_branch
          %514 = sbr.rel (%p512) target = $region72
        $region71: #{tpu_custom_call.1} parent=63 // pred_region
          %s515 = sand.u32 %s204, 1
          %s516 = scalar_lea.sflag [#allocation12], %s515
          %s517 = sand.u32 %s204, 1
          %s518 = smul.addr %s517, 8
          %s519 = scalar_lea.vmem [#allocation11], %s518
          %520 = dma.done %s516, 128
        $region72: #{tpu_custom_call.1} parent=63 // pred_fallthru
          _
      $region64: #{tpu_custom_call.1} parent=5 // pred_fallthru
        _
    $region6: #{tpu_custom_call.1} parent=1 // loop_footer
      %s29 = sadd.s32 1, %s25
    $region7: #{tpu_custom_call.1} parent=1 // loop_footer_branch
      %24 = sbr.rel target = $region3
    $region8: #{tpu_custom_call.1} parent=1 // loop_exit
      _
    %521 = vsyncpa [#allocation3], 1
    %s522 = scalar_lea.sflag [#allocation3], 1
    %523 = vsyncpa %s522, 1
    %524 = vsyncpa [#allocation6], 1
    %s525 = scalar_lea.sflag [#allocation6], 1
    %526 = vsyncpa %s525, 1
    %527 = vsyncpa [#allocation9], 1
    %528 = vsyncpa [#allocation4], 1
    %s529 = scalar_lea.sflag [#allocation4], 1
    %530 = vsyncpa %s529, 1
    %531 = vsyncpa [#allocation12], 1
    %s532 = scalar_lea.sflag [#allocation12], 1
    %533 = vsyncpa %s532, 1

</llo_original>
